<compile_context>
chip_gen: v7x
topology: tpu7x:2x2x1
jax: 0.10.0
libtpu: 0.0.40
codegen_flags: <defaults>
</compile_context>

<pallas_src>
import functools

import jax
import jax.numpy as jnp
from jax.experimental import pallas as pl
from jax.experimental.pallas import tpu as pltpu


# ---------------------------------------------------------------------------
# Kernels
# ---------------------------------------------------------------------------

def psr_pool_kernel(batch_ref, x_ref, sums_ref, cnts_ref, *,
                    n_nodes, tiles_per_split, pool_dtype, needs_mask):
    """Streaming one-hot segment-sum (global_mean_pool numerator) + node counts."""
    c = pl.program_id(0)          # node-split (TensorCore) index  -- "parallel"
    t = pl.program_id(1)          # node tile within this split    -- "arbitrary"
    B = sums_ref.shape[1]
    TN = x_ref.shape[0]

    # ---- init this split's partial accumulators on its first tile ----
    @pl.when(t == 0)
    def _():
        sums_ref[...] = jnp.zeros_like(sums_ref)
        cnts_ref[...] = jnp.zeros_like(cnts_ref)

    # ---- one-hot graph membership for this node tile ----
    batch_ids = batch_ref[...]                                        # (1, TN) int32
    graph_iota = jax.lax.broadcasted_iota(jnp.int32, (B, TN), 0)      # (B, TN)
    hit = graph_iota == batch_ids                                     # padded rows -> False
    onehot = hit.astype(pool_dtype)                                   # exact {0, 1}

    # ---- node features; mask ragged / duplicated tail rows (NaN-safe) ----
    x_tile = x_ref[...]
    if needs_mask:
        tile_idx = c * tiles_per_split + t
        row_ids = tile_idx * TN + jax.lax.broadcasted_iota(jnp.int32, (TN, 1), 0)
        x_tile = jnp.where(row_ids < n_nodes, x_tile, jnp.zeros_like(x_tile))
    x_tile = x_tile.astype(pool_dtype)

    # ---- accumulate directly into the resident f32 output blocks ----
    sums_ref[0] = sums_ref[0] + jnp.dot(onehot, x_tile,
                                        preferred_element_type=jnp.float32)
    cnts_ref[0] = cnts_ref[0] + jnp.sum(hit.astype(jnp.float32),
                                        axis=-1, keepdims=True)


def psr_head_kernel(sums_ref, cnts_ref, w1_ref, b1_ref, w2row_ref, b2_ref, out_ref):
    """Combine per-split partials, mean-pool divide, then Linear -> ReLU -> Linear."""
    n_splits = sums_ref.shape[0]
    sums = sums_ref[0]
    cnts = cnts_ref[0]
    for s in range(1, n_splits):                      # static, tiny
        sums = sums + sums_ref[s]
        cnts = cnts + cnts_ref[s]
    pooled = sums / jnp.maximum(cnts, 1.0)                                  # (B, D)
    h = jnp.dot(pooled, w1_ref[...], preferred_element_type=jnp.float32) + b1_ref[...]
    h = jnp.maximum(h, 0.0)                                                 # ReLU
    # Dropout: inference mode -> identity (no scaling).
    out = jnp.sum(h * w2row_ref[...], axis=-1, keepdims=True) + b2_ref[...]
    out_ref[...] = out.astype(out_ref.dtype)


# ---------------------------------------------------------------------------
# Wrapper
# ---------------------------------------------------------------------------

def _round_up(v, m):
    return -(-v // m) * m


def _choose_node_tile(n, d, itemsize, n_splits, max_block_bytes=8 << 20):
    """Largest 128-multiple row tile whose x block stays under max_block_bytes."""
    row_bytes = max(d, 1) * itemsize
    tn = (max_block_bytes // row_bytes) // 128 * 128
    tn = max(tn, 128)
    # No point tiling far past this split's share of the node count.
    per_split = _round_up(-(-n // n_splits), 128)
    return max(128, min(tn, per_split))


def _vmem_limit_bytes(tn, d, b, x_itemsize):
    lane = lambda v: _round_up(max(v, 1), 128)
    sub = lambda v: _round_up(max(v, 1), 8)
    x_blk = sub(tn) * lane(d) * x_itemsize
    bid_blk = sub(1) * lane(tn) * 4
    sums_blk = sub(b) * lane(d) * 4
    cnt_blk = sub(b) * lane(1) * 4
    total = 2 * (x_blk + bid_blk + sums_blk + cnt_blk) + (2 << 20)
    # 40 MiB clamp leaves headroom on v7x's 64 MiB VMEM; the 8 MiB block budget
    # keeps the typical total well under it anyway.
    return int(min(max(total, 8 << 20), 40 << 20))


def psr_forward(x, batch_ids, w1, b1, w2, b2, num_graphs, *,
                pool_dtype=jnp.bfloat16, num_node_splits=2):
    """x: [N, D] (bf16 or f32), batch_ids: [N] int -> predictions [num_graphs, 1] f32.

    pool_dtype controls the MXU operand dtype of the segment-sum (bf16 halves the HBM
    stream / doubles MXU rate; pass jnp.float32 for bit-faithful f32 module semantics).
    num_node_splits=2 splits the node stream across the two TensorCores on v7x and is
    neutral on single-TC chips (v5e/v6e).
    """
    N, D = x.shape
    H = w1.shape[1]
    B = int(num_graphs)
    NC = max(int(num_node_splits), 1)
    x_itemsize = jnp.dtype(x.dtype).itemsize

    TN = _choose_node_tile(N, D, x_itemsize, NC)
    num_x_tiles = -(-N // TN)                  # tiles needed to cover the real nodes
    TPC = -(-num_x_tiles // NC)                # tiles per split (rectangular grid)
    total_rows = NC * TPC * TN

    # Only the tiny int32 batch row gets padded (value == B so padded rows fall off the
    # one-hot mask); x itself is NOT padded / copied.
    batch_row = batch_ids.astype(jnp.int32)
    if total_rows != N:
        batch_row = jnp.pad(batch_row, (0, total_rows - N), constant_values=B)
    batch_row = batch_row.reshape(1, total_rows)

    # Splits past the real node range re-read the last valid x tile (clamped index) and
    # are zeroed by the in-kernel row mask.
    x_idx = lambda c, t: (jnp.minimum(c * TPC + t, num_x_tiles - 1), 0)

    grid_spec = pltpu.PrefetchScalarGridSpec(
        num_scalar_prefetch=0,
        grid=(NC, TPC),
        in_specs=[
            pl.BlockSpec((1, TN), lambda c, t: (0, c * TPC + t)),   # batch ids (streamed)
            pl.BlockSpec((TN, D), x_idx),                           # x (streamed)
        ],
        out_specs=[
            pl.BlockSpec((1, B, D), lambda c, t: (c, 0, 0)),        # partial segment sums
            pl.BlockSpec((1, B, 1), lambda c, t: (c, 0, 0)),        # partial node counts
        ],
    )

    cost = pl.CostEstimate(
        flops=2 * B * total_rows * D,
        transcendentals=0,
        bytes_accessed=N * D * x_itemsize + total_rows * 4 + NC * B * (D + 1) * 4,
    )

    kernel = functools.partial(
        psr_pool_kernel,
        n_nodes=N, tiles_per_split=TPC, pool_dtype=pool_dtype,
        needs_mask=(total_rows != N),
    )

    partial_sums, partial_cnts = pl.pallas_call(
        kernel,
        out_shape=(jax.ShapeDtypeStruct((NC, B, D), jnp.float32),
                   jax.ShapeDtypeStruct((NC, B, 1), jnp.float32)),
        grid_spec=grid_spec,
        compiler_params=pltpu.CompilerParams(
            dimension_semantics=("parallel", "arbitrary"),
            vmem_limit_bytes=_vmem_limit_bytes(TN, D, B, x_itemsize),
        ),
        cost_estimate=cost,
    )(batch_row, x)

    # Tiny finalize kernel: cross-split combine + mean + Linear->ReLU->Dropout(eval)->Linear.
    preds = pl.pallas_call(
        psr_head_kernel,
        out_shape=jax.ShapeDtypeStruct((B, 1), jnp.float32),
    )(partial_sums, partial_cnts,
      w1, b1.reshape(1, H), w2.reshape(1, H), b2.reshape(1, 1))
    return preds


# ---------------------------------------------------------------------------
# Reference + demo
# ---------------------------------------------------------------------------

def init_params(key, in_features):
    """Deterministic init for top_net: Linear(D, D//2), Linear(D//2, 1)."""
    h = in_features // 2
    k1, k2, k3, k4 = jax.random.split(key, 4)
    s1 = 1.0 / jnp.sqrt(in_features)
    s2 = 1.0 / jnp.sqrt(h)
    w1 = jax.random.uniform(k1, (in_features, h), jnp.float32, -s1, s1)
    b1 = jax.random.uniform(k2, (h,), jnp.float32, -s1, s1)
    w2 = jax.random.uniform(k3, (h, 1), jnp.float32, -s2, s2)
    b2 = jax.random.uniform(k4, (1,), jnp.float32, -s2, s2)
    return w1, b1, w2, b2


def reference_forward(x, batch_ids, w1, b1, w2, b2, num_graphs, pool_dtype=None):
    """Pure-JAX reference. pool_dtype=bf16 mirrors the kernel's MXU operand dtype."""
    onehot = (jnp.arange(num_graphs)[:, None] == batch_ids[None, :]).astype(jnp.float32)
    counts = onehot.sum(axis=1, keepdims=True)
    if pool_dtype is not None:
        pooled_sum = jnp.dot(onehot.astype(pool_dtype), x.astype(pool_dtype),
                             preferred_element_type=jnp.float32)
    else:
        pooled_sum = onehot @ x
    pooled = pooled_sum / jnp.maximum(counts, 1.0)
    h = jnp.maximum(pooled @ w1 + b1[None, :], 0.0)
    return h @ w2 + b2[None, :]


if __name__ == "__main__":
    key = jax.random.PRNGKey(0)
    k_x, k_p = jax.random.split(key)

    # Small synthetic "batch": 2 graphs, 300 nodes total (not a tile multiple, so the
    # ragged-tail masking and core-split clamping paths are exercised), encoded_dims = 32.
    num_graphs = 2
    N = 300
    encoded_dims = 32

    # TODO(synk): ProteinEncoder is external; graph.x is modelled as already-encoded node
    # features emitted by the encoder in bf16 (halves the HBM stream the kernel reads).
    x = jax.random.normal(k_x, (N, encoded_dims), dtype=jnp.float32).astype(jnp.bfloat16)
    batch_ids = jnp.concatenate([
        jnp.zeros((130,), dtype=jnp.int32),
        jnp.ones((N - 130,), dtype=jnp.int32),
    ])                                                                     # graph.batch

    w1, b1, w2, b2 = init_params(k_p, encoded_dims)

    preds = psr_forward(x, batch_ids, w1, b1, w2, b2, num_graphs)
    preds = jax.block_until_ready(preds)

    x_f32 = x.astype(jnp.float32)
    # Tight check against a reference that mirrors the kernel's bf16 MXU operands.
    ref_bf16 = reference_forward(x_f32, batch_ids, w1, b1, w2, b2, num_graphs,
                                 pool_dtype=jnp.bfloat16)
    # Loose check against pure-f32 module semantics on the (bf16-valued) encoder output.
    ref_f32 = reference_forward(x_f32, batch_ids, w1, b1, w2, b2, num_graphs,
                                pool_dtype=None)

    assert preds.shape == (num_graphs, 1)
    assert jnp.allclose(preds, ref_bf16, atol=1e-4, rtol=1e-4), (preds, ref_bf16)
    assert jnp.allclose(preds, ref_f32, atol=5e-2, rtol=5e-2), (preds, ref_f32)

    print("KERNEL_OK")
</pallas_src>

<mosaic_0001>
module attributes {stable_mosaic.version = 11 : i64} {
  func.func @psr_pool_kernel(%arg0: i32, %arg1: i32, %arg2: memref<1x256xi32, #tpu.memory_space<vmem>>, %arg3: memref<256x32xbf16, #tpu.memory_space<vmem>>, %arg4: memref<1x2x32xf32, #tpu.memory_space<vmem>>, %arg5: memref<1x2x1xf32, #tpu.memory_space<vmem>>) attributes {dimension_semantics = [#tpu.dimension_semantics<parallel>, #tpu.dimension_semantics<arbitrary>], iteration_bounds = array<i64: 2, 1>, scalar_prefetch = 0 : i64, scratch_operands = 0 : i64, tpu.core_type = #tpu.core_type<tc>, window_params = [{transform_indices = @transform_0, window_bounds = array<i64: 1, 256>}, {transform_indices = @transform_1, window_bounds = array<i64: 256, 32>}, {transform_indices = @transform_2, window_bounds = array<i64: 1, 2, 32>}, {transform_indices = @transform_3, window_bounds = array<i64: 1, 2, 1>}]} {
    %c0_i32 = arith.constant 0 : i32
    %0 = arith.cmpi eq, %arg1, %c0_i32 : i32
    %1 = arith.extui %0 : i1 to i32
    %c0_i32_0 = arith.constant 0 : i32
    %2 = arith.cmpi ne, %1, %c0_i32_0 : i32
    scf.if %2 {
      %cst_18 = arith.constant 0.000000e+00 : f32
      %40 = vector.broadcast %cst_18 : f32 to vector<1x2x32xf32>
      %c0_19 = arith.constant 0 : index
      %c0_20 = arith.constant 0 : index
      %c0_21 = arith.constant 0 : index
      %41 = vector.load %arg4[%c0_19, %c0_20, %c0_21] : memref<1x2x32xf32, #tpu.memory_space<vmem>>, vector<1x2x32xf32>
      tpu.vector_store %arg4[%c0_19, %c0_20, %c0_21], %40 {strides = array<i32>} : memref<1x2x32xf32, #tpu.memory_space<vmem>>, vector<1x2x32xf32>,
      %cst_22 = arith.constant 0.000000e+00 : f32
      %42 = vector.broadcast %cst_22 : f32 to vector<1x2x1xf32>
      %c0_23 = arith.constant 0 : index
      %c0_24 = arith.constant 0 : index
      %c0_25 = arith.constant 0 : index
      %43 = vector.load %arg5[%c0_23, %c0_24, %c0_25] : memref<1x2x1xf32, #tpu.memory_space<vmem>>, vector<1x2x1xf32>
      tpu.vector_store %arg5[%c0_23, %c0_24, %c0_25], %42 {strides = array<i32>} : memref<1x2x1xf32, #tpu.memory_space<vmem>>, vector<1x2x1xf32>,
    } else {
    }
    %c0 = arith.constant 0 : index
    %c0_1 = arith.constant 0 : index
    %3 = vector.load %arg2[%c0, %c0_1] : memref<1x256xi32, #tpu.memory_space<vmem>>, vector<1x256xi32>
    %4 = tpu.iota {dimensions = array<i32: 0>} : vector<2x256xi32>
    %5 = vector.broadcast %3 : vector<1x256xi32> to vector<2x256xi32>
    %6 = arith.cmpi eq, %4, %5 : vector<2x256xi32>
    %7 = arith.extui %6 : vector<2x256xi1> to vector<2x256xi32>
    %8 = arith.sitofp %7 : vector<2x256xi32> to vector<2x256xf32>
    %9 = arith.truncf %8 : vector<2x256xf32> to vector<2x256xbf16>
    %c0_2 = arith.constant 0 : index
    %c0_3 = arith.constant 0 : index
    %10 = vector.load %arg3[%c0_2, %c0_3] : memref<256x32xbf16, #tpu.memory_space<vmem>>, vector<256x32xbf16>
    %c1_i32 = arith.constant 1 : i32
    %11 = arith.muli %arg0, %c1_i32 : i32
    %12 = arith.addi %11, %arg1 : i32
    %c256_i32 = arith.constant 256 : i32
    %13 = arith.muli %12, %c256_i32 : i32
    %14 = tpu.iota {dimensions = array<i32: 0>} : vector<256x1xi32>
    %15 = vector.broadcast %13 : i32 to vector<256x1xi32>
    %16 = arith.addi %15, %14 : vector<256x1xi32>
    %c300_i32 = arith.constant 300 : i32
    %17 = vector.broadcast %c300_i32 : i32 to vector<256x1xi32>
    %18 = arith.cmpi slt, %16, %17 : vector<256x1xi32>
    %cst = arith.constant 0.000000e+00 : bf16
    %19 = vector.broadcast %cst : bf16 to vector<256x32xbf16>
    %20 = vector.shape_cast %18 : vector<256x1xi1> to vector<256x1xi1>
    %21 = vector.broadcast %20 : vector<256x1xi1> to vector<256x32xi1>
    %22 = arith.select %21, %10, %19 : vector<256x32xi1>, vector<256x32xbf16>
    %c0_4 = arith.constant 0 : index
    %c0_5 = arith.constant 0 : index
    %c0_6 = arith.constant 0 : index
    %23 = vector.load %arg4[%c0_4, %c0_5, %c0_6] : memref<1x2x32xf32, #tpu.memory_space<vmem>>, vector<1x2x32xf32>
    %24 = vector.shape_cast %23 : vector<1x2x32xf32> to vector<2x32xf32>
    %cst_7 = arith.constant dense<0.000000e+00> : vector<2x32xf32>
    %25 = tpu.matmul %9, %22, %cst_7 {dimension_numbers = #tpu.dot_dimension_numbers<[1], [0], [0], [1], [0, 0, 1, 1], [], []>} : vector<2x256xbf16>, vector<256x32xbf16>, vector<2x32xf32> -> vector<2x32xf32>
    %26 = arith.addf %24, %25 : vector<2x32xf32>
    %c0_8 = arith.constant 0 : index
    %c0_9 = arith.constant 0 : index
    %c0_10 = arith.constant 0 : index
    %27 = vector.load %arg4[%c0_8, %c0_9, %c0_10] : memref<1x2x32xf32, #tpu.memory_space<vmem>>, vector<1x2x32xf32>
    %28 = vector.shape_cast %27 : vector<1x2x32xf32> to vector<2x32xf32>
    %29 = vector.shape_cast %26 : vector<2x32xf32> to vector<1x2x32xf32>
    tpu.vector_store %arg4[%c0_8, %c0_9, %c0_10], %29 {strides = array<i32>} : memref<1x2x32xf32, #tpu.memory_space<vmem>>, vector<1x2x32xf32>,
    %c0_11 = arith.constant 0 : index
    %c0_12 = arith.constant 0 : index
    %c0_13 = arith.constant 0 : index
    %30 = vector.load %arg5[%c0_11, %c0_12, %c0_13] : memref<1x2x1xf32, #tpu.memory_space<vmem>>, vector<1x2x1xf32>
    %31 = vector.shape_cast %30 : vector<1x2x1xf32> to vector<2x1xf32>
    %32 = arith.extui %6 : vector<2x256xi1> to vector<2x256xi32>
    %33 = arith.sitofp %32 : vector<2x256xi32> to vector<2x256xf32>
    %cst_14 = arith.constant dense<0.000000e+00> : vector<2xf32>
    %34 = vector.multi_reduction <add>, %33, %cst_14 [1] : vector<2x256xf32> to vector<2xf32>
    %35 = vector.shape_cast %34 : vector<2xf32> to vector<2x1xf32>
    %36 = arith.addf %31, %35 : vector<2x1xf32>
    %c0_15 = arith.constant 0 : index
    %c0_16 = arith.constant 0 : index
    %c0_17 = arith.constant 0 : index
    %37 = vector.load %arg5[%c0_15, %c0_16, %c0_17] : memref<1x2x1xf32, #tpu.memory_space<vmem>>, vector<1x2x1xf32>
    %38 = vector.shape_cast %37 : vector<1x2x1xf32> to vector<2x1xf32>
    %39 = vector.shape_cast %36 : vector<2x1xf32> to vector<1x2x1xf32>
    tpu.vector_store %arg5[%c0_15, %c0_16, %c0_17], %39 {strides = array<i32>} : memref<1x2x1xf32, #tpu.memory_space<vmem>>, vector<1x2x1xf32>,
    return
  }
  func.func @transform_0(%arg0: i32, %arg1: i32) -> (i32, i32) {
    %c1_i32 = arith.constant 1 : i32
    %0 = arith.muli %arg0, %c1_i32 : i32
    %1 = arith.addi %0, %arg1 : i32
    %c0_i32 = arith.constant 0 : i32
    %c0_i32_0 = arith.constant 0 : i32
    return %c0_i32, %1 : i32, i32
  }
  func.func @transform_1(%arg0: i32, %arg1: i32) -> (i32, i32) {
    %c1_i32 = arith.constant 1 : i32
    %0 = arith.muli %arg0, %c1_i32 : i32
    %1 = arith.addi %0, %arg1 : i32
    %c1_i32_0 = arith.constant 1 : i32
    %2 = arith.minsi %1, %c1_i32_0 : i32
    %c0_i32 = arith.constant 0 : i32
    %c0_i32_1 = arith.constant 0 : i32
    return %2, %c0_i32 : i32, i32
  }
  func.func @transform_2(%arg0: i32, %arg1: i32) -> (i32, i32, i32) {
    %c0_i32 = arith.constant 0 : i32
    %c0_i32_0 = arith.constant 0 : i32
    %c0_i32_1 = arith.constant 0 : i32
    return %arg0, %c0_i32, %c0_i32_0 : i32, i32, i32
  }
  func.func @transform_3(%arg0: i32, %arg1: i32) -> (i32, i32, i32) {
    %c0_i32 = arith.constant 0 : i32
    %c0_i32_0 = arith.constant 0 : i32
    %c0_i32_1 = arith.constant 0 : i32
    return %arg0, %c0_i32, %c0_i32_0 : i32, i32, i32
  }
}

</mosaic_0001>

<llo_original>
// kernel: tpu_custom_call.1
$region0: #{tpu_custom_call.1}
  #allocation0 [shape = 'u32[]', space=smem, size = 0x4, offset = 0x4, fixed_abs, tag = 'smem constant byte address 0x4 - core index']
  #allocation1 [shape = 'u32[144,128]{1,0:T(1,128)}', space=vmem, size = 0x12000, scoped, tag = 'internal scratch']
  %s0 = inlined_call_operand.vmem [shape: s32[1,512], index: 0, kind: input, shape index: {}]
  %s1 = inlined_call_operand.vmem [shape: bf16[300,32], index: 1, kind: input, shape index: {}]
  %s2 = inlined_call_operand.hbm [shape: f32[2,2,32], index: 2, kind: output, shape index: {0}]
  %s3 = inlined_call_operand.vmem [shape: f32[2,2,1], index: 3, kind: output, shape index: {1}]
  %4 = xla_tuple %s2, %s3
  %s5 = sld [smem:[#allocation0]]
  $region53: #{tpu_custom_call.1} parent=0
    _
  %s7 = ssub.s32 1, %s5
  %s8 = scalar_select 0, %s7, %s5
  $region1: #{tpu_custom_call.1} parent=0
    #allocation2 [shape = 'u8[2048]{0}', space=vmem, size = 0x800, scoped, tag = 'output window, operand 0']
    #allocation3 [shape = 's32[2]{0}', space=sflag, size = 0x8, scoped, tag = 'scoped memory for tpu_custom_call.1']
    %9 = vsyncpa [#allocation3], 0
    %s10 = scalar_lea.sflag [#allocation3], 1
    %11 = vsyncpa %s10, 0
    loop: start=0, step=1, limit=4
    $region2: #{tpu_custom_call.1} parent=1 // loop_pre_header
      _
    $region3: #{tpu_custom_call.1} parent=1 // loop_header
      %s13 = sphi 0, %s17
      %p14 = scmp.ge.s32.totalorder %s13, 4
      %s20 = sphi 0, %s32
      %s21 = sphi 0, %s28
      %s22 = sphi 0, %s20
      %s23 = sphi 0, %s21
      %s24 = sphi 0, %s22
      %s25 = sphi 0, %s23
      %s37 = sphi 0, %s39
      %s40 = sphi 0, %s37
      %s41 = sphi 0, %s40
      %s57 = sphi 0, %s41
      %s69 = sphi 0, %s71
      %s72 = sphi 0, %s69
      %s73 = sphi 0, %s72
      %s89 = sphi 0, %s73
      %s95 = sphi 0, %s97
      %s98 = sphi 0, %s95
      %s99 = sphi 0, %s98
      %s115 = sphi 0, %s99
      %s121 = sphi 0, %s123
      %s124 = sphi 0, %s121
      %s125 = sphi 0, %s124
      %s141 = sphi 0, %s125
    $region4: #{tpu_custom_call.1} parent=1 // loop_header_branch
      %16 = sbr.rel (%p14) target = $region8
    $region5: #{tpu_custom_call.1} parent=1 // loop_body
      %s18 = ssub.s32 %s13, 1
      %s19 = ssub.s32 %s13, 2
      %s26 = sadd.s32 1, %s21
      %p27 = scmp.ge.s32.totalorder %s26, 1
      %s28 = scalar_select %p27, 0, %s26
      %s29 = sadd.s32 1, %s20
      %s30 = scalar_select %p27, %s29, %s20
      %p31 = scmp.ge.s32.totalorder %s30, 2
      %s32 = scalar_select %p31, 0, %s30
      %s33 = sadd.s32 %s20, %s21
      %s34 = sadd.s32 %s32, %s28
      %s35 = ssub.s32 %s33, %s34
      %p36 = scmp.eq.s32.totalorder %s35, 0
      %s38 = sadd.s32 %s37, 1
      %s39 = scalar_select %p36, %s37, %s38
      %p42 = pneg %p36
      %p43 = scmp.eq.s32.totalorder %s13, 1
      %p44 = por %p42, %p43
      %p45 = scmp.ne.s32.totalorder %s37, %s40
      %p46 = scmp.eq.s32.totalorder %s13, 0
      %p47 = por %p45, %p46
      %p48 = scmp.ne.s32.totalorder %s37, %s40
      %p49 = scmp.eq.s32.totalorder %s18, 1
      %p50 = por %p48, %p49
      %p51 = scmp.ne.s32.totalorder %s40, %s41
      %p52 = scmp.eq.s32.totalorder %s18, 0
      %p53 = por %p51, %p52
      %p54 = scmp.ne.s32.totalorder %s40, %s41
      %p55 = scmp.eq.s32.totalorder %s19, 1
      %p56 = por %p54, %p55
      %p58 = scmp.ne.s32.totalorder %s41, %s57
      %p59 = scmp.eq.s32.totalorder %s19, 0
      %p60 = por %p58, %p59
      %s61 = sadd.s32 %s20, %s21
      %p62 = scmp.lt.s32.totalorder %s61, 1
      %s63 = scalar_select %p62, %s61, 1
      %s64 = sadd.s32 %s32, %s28
      %p65 = scmp.lt.s32.totalorder %s64, 1
      %s66 = scalar_select %p65, %s64, 1
      %s67 = ssub.s32 %s63, %s66
      %p68 = scmp.eq.s32.totalorder %s67, 0
      %s70 = sadd.s32 %s69, 1
      %s71 = scalar_select %p68, %s69, %s70
      %p74 = pneg %p68
      %p75 = scmp.eq.s32.totalorder %s13, 1
      %p76 = por %p74, %p75
      %p77 = scmp.ne.s32.totalorder %s69, %s72
      %p78 = scmp.eq.s32.totalorder %s13, 0
      %p79 = por %p77, %p78
      %p80 = scmp.ne.s32.totalorder %s69, %s72
      %p81 = scmp.eq.s32.totalorder %s18, 1
      %p82 = por %p80, %p81
      %p83 = scmp.ne.s32.totalorder %s72, %s73
      %p84 = scmp.eq.s32.totalorder %s18, 0
      %p85 = por %p83, %p84
      %p86 = scmp.ne.s32.totalorder %s72, %s73
      %p87 = scmp.eq.s32.totalorder %s19, 1
      %p88 = por %p86, %p87
      %p90 = scmp.ne.s32.totalorder %s73, %s89
      %p91 = scmp.eq.s32.totalorder %s19, 0
      %p92 = por %p90, %p91
      %s93 = ssub.s32 %s20, %s32
      %p94 = scmp.eq.s32.totalorder %s93, 0
      %s96 = sadd.s32 %s95, 1
      %s97 = scalar_select %p94, %s95, %s96
      %p100 = pneg %p94
      %p101 = scmp.eq.s32.totalorder %s13, 1
      %p102 = por %p100, %p101
      %p103 = scmp.ne.s32.totalorder %s95, %s98
      %p104 = scmp.eq.s32.totalorder %s13, 0
      %p105 = por %p103, %p104
      %p106 = scmp.ne.s32.totalorder %s95, %s98
      %p107 = scmp.eq.s32.totalorder %s18, 1
      %p108 = por %p106, %p107
      %p109 = scmp.ne.s32.totalorder %s98, %s99
      %p110 = scmp.eq.s32.totalorder %s18, 0
      %p111 = por %p109, %p110
      %p112 = scmp.ne.s32.totalorder %s98, %s99
      %p113 = scmp.eq.s32.totalorder %s19, 1
      %p114 = por %p112, %p113
      %p116 = scmp.ne.s32.totalorder %s99, %s115
      %p117 = scmp.eq.s32.totalorder %s19, 0
      %p118 = por %p116, %p117
      %s119 = ssub.s32 %s20, %s32
      %p120 = scmp.eq.s32.totalorder %s119, 0
      %s122 = sadd.s32 %s121, 1
      %s123 = scalar_select %p120, %s121, %s122
      %p126 = pneg %p120
      %p127 = scmp.eq.s32.totalorder %s13, 1
      %p128 = por %p126, %p127
      %p129 = scmp.ne.s32.totalorder %s121, %s124
      %p130 = scmp.eq.s32.totalorder %s13, 0
      %p131 = por %p129, %p130
      %p132 = scmp.ne.s32.totalorder %s121, %s124
      %p133 = scmp.eq.s32.totalorder %s18, 1
      %p134 = por %p132, %p133
      %p135 = scmp.ne.s32.totalorder %s124, %s125
      %p136 = scmp.eq.s32.totalorder %s18, 0
      %p137 = por %p135, %p136
      %p138 = scmp.ne.s32.totalorder %s124, %s125
      %p139 = scmp.eq.s32.totalorder %s19, 1
      %p140 = por %p138, %p139
      %p142 = scmp.ne.s32.totalorder %s125, %s141
      %p143 = scmp.eq.s32.totalorder %s19, 0
      %p144 = por %p142, %p143
      %p145 = scmp.le.s32.totalorder 1, %s13
      %p146 = scmp.lt.s32.totalorder %s13, 3
      %p147 = pnand %p145, %p146
      %p148 = pneg %p147
      // Predicated region
      $region9: #{tpu_custom_call.1} parent=5 // pred_check
        _
      $region10: #{tpu_custom_call.1} parent=5 // pred_check_branch
        %150 = sbr.rel (%p147) target = $region12
      $region11: #{tpu_custom_call.1} parent=5 // pred_region
        %s151 = ssub.s32 %s13, 1
      $region12: #{tpu_custom_call.1} parent=5 // pred_fallthru
        _
      %p152 = scmp.lt.s32.totalorder %s13, 2
      // Predicated region
      $region13: #{tpu_custom_call.1} parent=5 // pred_check
        %p153 = pneg %p152
      $region14: #{tpu_custom_call.1} parent=5 // pred_check_branch
        %155 = sbr.rel (%p153) target = $region16
      $region15: #{tpu_custom_call.1} parent=5 // pred_region
        // Predicated region
        $region17: #{tpu_custom_call.1} parent=15 // pred_check
          %p156 = pneg %p47
        $region18: #{tpu_custom_call.1} parent=15 // pred_check_branch
          %158 = sbr.rel (%p156) target = $region20
        $region19: #{tpu_custom_call.1} parent=15 // pred_region
          %s159 = sadd.s32 %s20, %s21
          %s160 = smul.u32 2, %s159
          %p161 = scmp.lt.s32.totalorder %s160, 3
          %s162 = scalar_select %p161, %s160, 3
          %s163 = scalar_lea.vmem %s0, %s162
          %s164 = sadd.s32 %s20, %s21
          %s165 = smul.u32 2, %s164
        $region20: #{tpu_custom_call.1} parent=15 // pred_fallthru
          _
        // Predicated region
        $region21: #{tpu_custom_call.1} parent=15 // pred_check
          %p166 = pneg %p79
        $region22: #{tpu_custom_call.1} parent=15 // pred_check_branch
          %168 = sbr.rel (%p166) target = $region24
        $region23: #{tpu_custom_call.1} parent=15 // pred_region
          %s169 = sadd.s32 %s20, %s21
          %p170 = scmp.lt.s32.totalorder %s169, 1
          %s171 = scalar_select %p170, %s169, 1
          %s172 = smul.u32 32, %s171
          %s173 = ssub.s32 38, %s172
          %p174 = scmp.lt.s32.totalorder %s173, 32
          %s175 = scalar_select %p174, %s173, 32
          %s176 = smul.u32 64, %s175
          %p177 = scmp.lt.s32.totalorder %s172, 37
          %s178 = scalar_select %p177, %s172, 37
          %s179 = smul.addr %s178, 4
          %s180 = scalar_lea.vmem %s1, %s179
          %s181 = sadd.s32 %s20, %s21
          %p182 = scmp.lt.s32.totalorder %s181, 1
          %s183 = scalar_select %p182, %s181, 1
          %s184 = smul.u32 32, %s183
          %s185 = ssub.s32 38, %s184
          %p186 = scmp.lt.s32.totalorder %s185, 32
          %s187 = scalar_select %p186, %s185, 32
          %s188 = smul.u32 64, %s187
        $region24: #{tpu_custom_call.1} parent=15 // pred_fallthru
          _
      $region16: #{tpu_custom_call.1} parent=5 // pred_fallthru
        _
      %p189 = scmp.le.s32.totalorder 1, %s13
      %p190 = scmp.lt.s32.totalorder %s13, 3
      %p191 = pnand %p189, %p190
      %p192 = pneg %p191
      // Predicated region
      $region25: #{tpu_custom_call.1} parent=5 // pred_check
        _
      $region26: #{tpu_custom_call.1} parent=5 // pred_check_branch
        %194 = sbr.rel (%p191) target = $region28
      $region27: #{tpu_custom_call.1} parent=5 // pred_region
        %s195 = ssub.s32 %s13, 1
        %s196 = sadd.s32 %s22, %s23
        %s197 = smul.u32 2, %s196
        %p198 = scmp.lt.s32.totalorder %s197, 3
        %s199 = scalar_select %p198, %s197, 3
        %s200 = scalar_lea.vmem %s0, %s199
        %p201 = pneg %p53
        %p202 = pneg %p50
        %s203 = sadd.s32 %s22, %s23
        %p204 = scmp.lt.s32.totalorder %s203, 1
        %s205 = scalar_select %p204, %s203, 1
        %s206 = smul.u32 32, %s205
        %s207 = ssub.s32 38, %s206
        %p208 = scmp.lt.s32.totalorder %s207, 32
        %s209 = scalar_select %p208, %s207, 32
        %s210 = smul.u32 64, %s209
        %p211 = scmp.lt.s32.totalorder %s206, 37
        %s212 = scalar_select %p211, %s206, 37
        %s213 = smul.addr %s212, 4
        %s214 = scalar_lea.vmem %s1, %s213
        %p215 = pneg %p85
        %p216 = pneg %p82
        %p217 = pneg %p111
        %p218 = pneg %p108
        %s219 = sand.u32 %s98, 1
        %s220 = scalar_lea.sflag [#allocation3], %s219
        %s221 = sand.u32 %s98, 1
        %s222 = smul.addr %s221, 2
        %s223 = scalar_lea.vmem [#allocation2], %s222
        %p224 = pneg %p137
        %p225 = pneg %p134
        %p226 = scmp.lt.s32.totalorder %s22, 1
        %s227 = scalar_select %p226, %s22, 1
        %s228 = smul.addr %s227, 2
        %s229 = scalar_lea.vmem %s3, %s228
        %s230 = sadd.s32 %s22, %s23
        %s231 = smul.u32 2, %s230
        %p232 = scmp.lt.s32.totalorder %s231, 3
        %s233 = scalar_select %p232, %s231, 3
        %s234 = scalar_lea.vmem %s0, %s233
        %s235 = sadd.s32 %s22, %s23
        %s236 = smul.u32 2, %s235
        %s237 = sadd.s32 %s22, %s23
        %p238 = scmp.lt.s32.totalorder %s237, 1
        %s239 = scalar_select %p238, %s237, 1
        %s240 = smul.u32 32, %s239
        %s241 = ssub.s32 38, %s240
        %p242 = scmp.lt.s32.totalorder %s241, 32
        %s243 = scalar_select %p242, %s241, 32
        %s244 = smul.u32 64, %s243
        %p245 = scmp.lt.s32.totalorder %s240, 37
        %s246 = scalar_select %p245, %s240, 37
        %s247 = smul.addr %s246, 4
        %s248 = scalar_lea.vmem %s1, %s247
        %s249 = sadd.s32 %s22, %s23
        %p250 = scmp.lt.s32.totalorder %s249, 1
        %s251 = scalar_select %p250, %s249, 1
        %s252 = smul.u32 32, %s251
        %s253 = ssub.s32 38, %s252
        %p254 = scmp.lt.s32.totalorder %s253, 32
        %s255 = scalar_select %p254, %s253, 32
        %s256 = smul.u32 64, %s255
        %p257 = scmp.lt.s32.totalorder %s22, 1
        %s258 = scalar_select %p257, %s22, 1
        %s259 = smul.addr %s258, 2
        %s260 = scalar_lea.vmem %s3, %s259
        %p262 = scmp.eq.s32.totalorder %s23, 0
        // Predicated region
        $region29: #{tpu_custom_call.1} parent=27 // pred_check
          %p263 = pneg %p262
        $region30: #{tpu_custom_call.1} parent=27 // pred_check_branch
          %265 = sbr.rel (%p263) target = $region32
        $region31: #{tpu_custom_call.1} parent=27 // pred_region
          %vm266 = vcmask 254976
          %267 = vst.msk [vmem:[%s223] sm:$0x3] %vm266, 0.0
          %vm268 = vcmask 1024
          %269 = vst.msk [vmem:[%s260] sm:$0x3] %vm268, 0.0
        $region32: #{tpu_custom_call.1} parent=27 // pred_fallthru
          _
        %v270 = vld [vmem:[%s234] sm:$0x3]
        %v271 = vlaneseq
        %v272 = vshrl.u32 %v271, 7
        %v273 = vlaneseq
        %v274 = vshrl.u32 %v273, 7
        %v275 = vsub.s32 0, %v274
        %v276 = vrot.slane %v270, %v275
        %v277 = vlaneseq
        %v278 = vshrl.u32 %v277, 7
        %v279 = vsub.s32 1, %v278
        %v280 = vrot.slane %v270, %v279
        %vm281 = vcmp.eq.s32.totalorder %v272, %v276
        %vm282 = vcmp.eq.s32.totalorder %v272, %v280
        %v283 = vsel %vm281, 1, 0
        %v284 = vsel %vm282, 1, 0
        %v285 = vcvt.s32.f32 %v283
        %v286 = vcvt.s32.f32 %v284
        %v287 = vpack.c.bf16 %v285, %v285
        %v288 = vpack.c.bf16 %v286, %v286
        %v289 = vld [vmem:[%s248] sm:$0xf]
        %v290 = vld [vmem:[%s248 + $0x4] sm:$0xf]
        %v291 = vld [vmem:[%s248 + $0x8] sm:$0xf]
        %v292 = vld [vmem:[%s248 + $0xc] sm:$0xf]
        %v293 = vld [vmem:[%s248 + $0x10] sm:$0xf]
        %v294 = vld [vmem:[%s248 + $0x14] sm:$0xf]
        %v295 = vld [vmem:[%s248 + $0x18] sm:$0xf]
        %v296 = vld [vmem:[%s248 + $0x1c] sm:$0xf]
        %v297 = vld [vmem:[%s248 + $0x20] sm:$0xf]
        %v298 = vld [vmem:[%s248 + $0x24] sm:$0xf]
        %v299 = vld [vmem:[%s248 + $0x28] sm:$0xf]
        %v300 = vld [vmem:[%s248 + $0x2c] sm:$0xf]
        %v301 = vld [vmem:[%s248 + $0x30] sm:$0xf]
        %v302 = vld [vmem:[%s248 + $0x34] sm:$0xf]
        %v303 = vld [vmem:[%s248 + $0x38] sm:$0xf]
        %v304 = vld [vmem:[%s248 + $0x3c] sm:$0xf]
        %v305 = vld [vmem:[%s248 + $0x40] sm:$0xf]
        %v306 = vld [vmem:[%s248 + $0x44] sm:$0xf]
        %v307 = vld [vmem:[%s248 + $0x48] sm:$0xf]
        %v308 = vld [vmem:[%s248 + $0x4c] sm:$0xf]
        %v309 = vld [vmem:[%s248 + $0x50] sm:$0xf]
        %v310 = vld [vmem:[%s248 + $0x54] sm:$0xf]
        %v311 = vld [vmem:[%s248 + $0x58] sm:$0xf]
        %v312 = vld [vmem:[%s248 + $0x5c] sm:$0xf]
        %v313 = vld [vmem:[%s248 + $0x60] sm:$0xf]
        %v314 = vld [vmem:[%s248 + $0x64] sm:$0xf]
        %v315 = vld [vmem:[%s248 + $0x68] sm:$0xf]
        %v316 = vld [vmem:[%s248 + $0x6c] sm:$0xf]
        %v317 = vld [vmem:[%s248 + $0x70] sm:$0xf]
        %v318 = vld [vmem:[%s248 + $0x74] sm:$0xf]
        %v319 = vld [vmem:[%s248 + $0x78] sm:$0xf]
        %v320 = vld [vmem:[%s248 + $0x7c] sm:$0xf]
        %s321 = sadd.s32 %s22, %s23
        %s322 = smul.u32 %s321, 256
        %v323 = vadd.s32 %v272, 8
        %v324 = vadd.s32 %v272, 16
        %v325 = vadd.s32 %v272, 24
        %v326 = vadd.s32 %v272, 32
        %v327 = vadd.s32 %v272, 40
        %v328 = vadd.s32 %v272, 48
        %v329 = vadd.s32 %v272, 56
        %v330 = vadd.s32 %v272, 64
        %v331 = vadd.s32 %v272, 72
        %v332 = vadd.s32 %v272, 80
        %v333 = vadd.s32 %v272, 88
        %v334 = vadd.s32 %v272, 96
        %v335 = vadd.s32 %v272, 104
        %v336 = vadd.s32 %v272, 112
        %v337 = vadd.s32 %v272, 120
        %v338 = vadd.s32 %v272, 128
        %v339 = vadd.s32 %v272, 136
        %v340 = vadd.s32 %v272, 144
        %v341 = vadd.s32 %v272, 152
        %v342 = vadd.s32 %v272, 160
        %v343 = vadd.s32 %v272, 168
        %v344 = vadd.s32 %v272, 176
        %v345 = vadd.s32 %v272, 184
        %v346 = vadd.s32 %v272, 192
        %v347 = vadd.s32 %v272, 200
        %v348 = vadd.s32 %v272, 208
        %v349 = vadd.s32 %v272, 216
        %v350 = vadd.s32 %v272, 224
        %v351 = vadd.s32 %v272, 232
        %v352 = vadd.s32 %v272, 240
        %v353 = vadd.s32 %v272, 248
        %v354 = vstv %s322
        %v355 = vadd.s32 %v354, %v272
        %v356 = vadd.s32 %v354, %v323
        %v357 = vadd.s32 %v354, %v324
        %v358 = vadd.s32 %v354, %v325
        %v359 = vadd.s32 %v354, %v326
        %v360 = vadd.s32 %v354, %v327
        %v361 = vadd.s32 %v354, %v328
        %v362 = vadd.s32 %v354, %v329
        %v363 = vadd.s32 %v354, %v330
        %v364 = vadd.s32 %v354, %v331
        %v365 = vadd.s32 %v354, %v332
        %v366 = vadd.s32 %v354, %v333
        %v367 = vadd.s32 %v354, %v334
        %v368 = vadd.s32 %v354, %v335
        %v369 = vadd.s32 %v354, %v336
        %v370 = vadd.s32 %v354, %v337
        %v371 = vadd.s32 %v354, %v338
        %v372 = vadd.s32 %v354, %v339
        %v373 = vadd.s32 %v354, %v340
        %v374 = vadd.s32 %v354, %v341
        %v375 = vadd.s32 %v354, %v342
        %v376 = vadd.s32 %v354, %v343
        %v377 = vadd.s32 %v354, %v344
        %v378 = vadd.s32 %v354, %v345
        %v379 = vadd.s32 %v354, %v346
        %v380 = vadd.s32 %v354, %v347
        %v381 = vadd.s32 %v354, %v348
        %v382 = vadd.s32 %v354, %v349
        %v383 = vadd.s32 %v354, %v350
        %v384 = vadd.s32 %v354, %v351
        %v385 = vadd.s32 %v354, %v352
        %v386 = vadd.s32 %v354, %v353
        %vm387 = vcmp.lt.s32.totalorder %v355, 300
        %vm388 = vcmp.lt.s32.totalorder %v356, 300
        %vm389 = vcmp.lt.s32.totalorder %v357, 300
        %vm390 = vcmp.lt.s32.totalorder %v358, 300
        %vm391 = vcmp.lt.s32.totalorder %v359, 300
        %vm392 = vcmp.lt.s32.totalorder %v360, 300
        %vm393 = vcmp.lt.s32.totalorder %v361, 300
        %vm394 = vcmp.lt.s32.totalorder %v362, 300
        %vm395 = vcmp.lt.s32.totalorder %v363, 300
        %vm396 = vcmp.lt.s32.totalorder %v364, 300
        %vm397 = vcmp.lt.s32.totalorder %v365, 300
        %vm398 = vcmp.lt.s32.totalorder %v366, 300
        %vm399 = vcmp.lt.s32.totalorder %v367, 300
        %vm400 = vcmp.lt.s32.totalorder %v368, 300
        %vm401 = vcmp.lt.s32.totalorder %v369, 300
        %vm402 = vcmp.lt.s32.totalorder %v370, 300
        %vm403 = vcmp.lt.s32.totalorder %v371, 300
        %vm404 = vcmp.lt.s32.totalorder %v372, 300
        %vm405 = vcmp.lt.s32.totalorder %v373, 300
        %vm406 = vcmp.lt.s32.totalorder %v374, 300
        %vm407 = vcmp.lt.s32.totalorder %v375, 300
        %vm408 = vcmp.lt.s32.totalorder %v376, 300
        %vm409 = vcmp.lt.s32.totalorder %v377, 300
        %vm410 = vcmp.lt.s32.totalorder %v378, 300
        %vm411 = vcmp.lt.s32.totalorder %v379, 300
        %vm412 = vcmp.lt.s32.totalorder %v380, 300
        %vm413 = vcmp.lt.s32.totalorder %v381, 300
        %vm414 = vcmp.lt.s32.totalorder %v382, 300
        %vm415 = vcmp.lt.s32.totalorder %v383, 300
        %vm416 = vcmp.lt.s32.totalorder %v384, 300
        %vm417 = vcmp.lt.s32.totalorder %v385, 300
        %vm418 = vcmp.lt.s32.totalorder %v386, 300
        %v419 = vsel %vm387, 1, 0
        %v420 = vsel %vm388, 1, 0
        %v421 = vsel %vm389, 1, 0
        %v422 = vsel %vm390, 1, 0
        %v423 = vsel %vm391, 1, 0
        %v424 = vsel %vm392, 1, 0
        %v425 = vsel %vm393, 1, 0
        %v426 = vsel %vm394, 1, 0
        %v427 = vsel %vm395, 1, 0
        %v428 = vsel %vm396, 1, 0
        %v429 = vsel %vm397, 1, 0
        %v430 = vsel %vm398, 1, 0
        %v431 = vsel %vm399, 1, 0
        %v432 = vsel %vm400, 1, 0
        %v433 = vsel %vm401, 1, 0
        %v434 = vsel %vm402, 1, 0
        %v435 = vsel %vm403, 1, 0
        %v436 = vsel %vm404, 1, 0
        %v437 = vsel %vm405, 1, 0
        %v438 = vsel %vm406, 1, 0
        %v439 = vsel %vm407, 1, 0
        %v440 = vsel %vm408, 1, 0
        %v441 = vsel %vm409, 1, 0
        %v442 = vsel %vm410, 1, 0
        %v443 = vsel %vm411, 1, 0
        %v444 = vsel %vm412, 1, 0
        %v445 = vsel %vm413, 1, 0
        %v446 = vsel %vm414, 1, 0
        %v447 = vsel %vm415, 1, 0
        %v448 = vsel %vm416, 1, 0
        %v449 = vsel %vm417, 1, 0
        %v450 = vsel %vm418, 1, 0
        %vm451 = vcmp.eq.s32.totalorder %v419, 1
        %vm452 = vcmp.eq.s32.totalorder %v420, 1
        %vm453 = vcmp.eq.s32.totalorder %v421, 1
        %vm454 = vcmp.eq.s32.totalorder %v422, 1
        %vm455 = vcmp.eq.s32.totalorder %v423, 1
        %vm456 = vcmp.eq.s32.totalorder %v424, 1
        %vm457 = vcmp.eq.s32.totalorder %v425, 1
        %vm458 = vcmp.eq.s32.totalorder %v426, 1
        %vm459 = vcmp.eq.s32.totalorder %v427, 1
        %vm460 = vcmp.eq.s32.totalorder %v428, 1
        %vm461 = vcmp.eq.s32.totalorder %v429, 1
        %vm462 = vcmp.eq.s32.totalorder %v430, 1
        %vm463 = vcmp.eq.s32.totalorder %v431, 1
        %vm464 = vcmp.eq.s32.totalorder %v432, 1
        %vm465 = vcmp.eq.s32.totalorder %v433, 1
        %vm466 = vcmp.eq.s32.totalorder %v434, 1
        %vm467 = vcmp.eq.s32.totalorder %v435, 1
        %vm468 = vcmp.eq.s32.totalorder %v436, 1
        %vm469 = vcmp.eq.s32.totalorder %v437, 1
        %vm470 = vcmp.eq.s32.totalorder %v438, 1
        %vm471 = vcmp.eq.s32.totalorder %v439, 1
        %vm472 = vcmp.eq.s32.totalorder %v440, 1
        %vm473 = vcmp.eq.s32.totalorder %v441, 1
        %vm474 = vcmp.eq.s32.totalorder %v442, 1
        %vm475 = vcmp.eq.s32.totalorder %v443, 1
        %vm476 = vcmp.eq.s32.totalorder %v444, 1
        %vm477 = vcmp.eq.s32.totalorder %v445, 1
        %vm478 = vcmp.eq.s32.totalorder %v446, 1
        %vm479 = vcmp.eq.s32.totalorder %v447, 1
        %vm480 = vcmp.eq.s32.totalorder %v448, 1
        %vm481 = vcmp.eq.s32.totalorder %v449, 1
        %vm482 = vcmp.eq.s32.totalorder %v450, 1
        %vm483 = vmpackc.low %vm451, %vm451
        %vm484 = vmpackc.low %vm452, %vm452
        %vm485 = vmpackc.low %vm453, %vm453
        %vm486 = vmpackc.low %vm454, %vm454
        %vm487 = vmpackc.low %vm455, %vm455
        %vm488 = vmpackc.low %vm456, %vm456
        %vm489 = vmpackc.low %vm457, %vm457
        %vm490 = vmpackc.low %vm458, %vm458
        %vm491 = vmpackc.low %vm459, %vm459
        %vm492 = vmpackc.low %vm460, %vm460
        %vm493 = vmpackc.low %vm461, %vm461
        %vm494 = vmpackc.low %vm462, %vm462
        %vm495 = vmpackc.low %vm463, %vm463
        %vm496 = vmpackc.low %vm464, %vm464
        %vm497 = vmpackc.low %vm465, %vm465
        %vm498 = vmpackc.low %vm466, %vm466
        %vm499 = vmpackc.low %vm467, %vm467
        %vm500 = vmpackc.low %vm468, %vm468
        %vm501 = vmpackc.low %vm469, %vm469
        %vm502 = vmpackc.low %vm470, %vm470
        %vm503 = vmpackc.low %vm471, %vm471
        %vm504 = vmpackc.low %vm472, %vm472
        %vm505 = vmpackc.low %vm473, %vm473
        %vm506 = vmpackc.low %vm474, %vm474
        %vm507 = vmpackc.low %vm475, %vm475
        %vm508 = vmpackc.low %vm476, %vm476
        %vm509 = vmpackc.low %vm477, %vm477
        %vm510 = vmpackc.low %vm478, %vm478
        %vm511 = vmpackc.low %vm479, %vm479
        %vm512 = vmpackc.low %vm480, %vm480
        %vm513 = vmpackc.low %vm481, %vm481
        %vm514 = vmpackc.low %vm482, %vm482
        %v515 = vsel %vm483, %v289, 0
        %v516 = vsel %vm484, %v290, 0
        %v517 = vsel %vm485, %v291, 0
        %v518 = vsel %vm486, %v292, 0
        %v519 = vsel %vm487, %v293, 0
        %v520 = vsel %vm488, %v294, 0
        %v521 = vsel %vm489, %v295, 0
        %v522 = vsel %vm490, %v296, 0
        %v523 = vsel %vm491, %v297, 0
        %v524 = vsel %vm492, %v298, 0
        %v525 = vsel %vm493, %v299, 0
        %v526 = vsel %vm494, %v300, 0
        %v527 = vsel %vm495, %v301, 0
        %v528 = vsel %vm496, %v302, 0
        %v529 = vsel %vm497, %v303, 0
        %v530 = vsel %vm498, %v304, 0
        %v531 = vsel %vm499, %v305, 0
        %v532 = vsel %vm500, %v306, 0
        %v533 = vsel %vm501, %v307, 0
        %v534 = vsel %vm502, %v308, 0
        %v535 = vsel %vm503, %v309, 0
        %v536 = vsel %vm504, %v310, 0
        %v537 = vsel %vm505, %v311, 0
        %v538 = vsel %vm506, %v312, 0
        %v539 = vsel %vm507, %v313, 0
        %v540 = vsel %vm508, %v314, 0
        %v541 = vsel %vm509, %v315, 0
        %v542 = vsel %vm510, %v316, 0
        %v543 = vsel %vm511, %v317, 0
        %v544 = vsel %vm512, %v318, 0
        %v545 = vsel %vm513, %v319, 0
        %v546 = vsel %vm514, %v320, 0
        %v547 = vld [vmem:[%s223] sm:$0x3]
        %v580 = vunpack.c.l.b16 %v515
        %v581 = vunpack.c.l.b16 %v516
        %v582 = vunpack.c.l.b16 %v517
        %v583 = vunpack.c.l.b16 %v518
        %v584 = vunpack.c.l.b16 %v519
        %v585 = vunpack.c.l.b16 %v520
        %v586 = vunpack.c.l.b16 %v521
        %v587 = vunpack.c.l.b16 %v522
        %v588 = vunpack.c.l.b16 %v523
        %v589 = vunpack.c.l.b16 %v524
        %v590 = vunpack.c.l.b16 %v525
        %v591 = vunpack.c.l.b16 %v526
        %v592 = vunpack.c.l.b16 %v527
        %v593 = vunpack.c.l.b16 %v528
        %v594 = vunpack.c.l.b16 %v529
        %v595 = vunpack.c.l.b16 %v530
        %v596 = vunpack.c.l.b16 %v531
        %v597 = vunpack.c.l.b16 %v532
        %v598 = vunpack.c.l.b16 %v533
        %v599 = vunpack.c.l.b16 %v534
        %v600 = vunpack.c.l.b16 %v535
        %v601 = vunpack.c.l.b16 %v536
        %v602 = vunpack.c.l.b16 %v537
        %v603 = vunpack.c.l.b16 %v538
        %v604 = vunpack.c.l.b16 %v539
        %v605 = vunpack.c.l.b16 %v540
        %v606 = vunpack.c.l.b16 %v541
        %v607 = vunpack.c.l.b16 %v542
        %v608 = vunpack.c.l.b16 %v543
        %v609 = vunpack.c.l.b16 %v544
        %v610 = vunpack.c.l.b16 %v545
        %v611 = vunpack.c.l.b16 %v546
        %v612 = vpack.c.b16 %v581, %v580
        %v613 = vpack.c.b16 %v583, %v582
        %v614 = vpack.c.b16 %v585, %v584
        %v615 = vpack.c.b16 %v587, %v586
        %v616 = vpack.c.b16 %v589, %v588
        %v617 = vpack.c.b16 %v591, %v590
        %v618 = vpack.c.b16 %v593, %v592
        %v619 = vpack.c.b16 %v595, %v594
        %v620 = vpack.c.b16 %v597, %v596
        %v621 = vpack.c.b16 %v599, %v598
        %v622 = vpack.c.b16 %v601, %v600
        %v623 = vpack.c.b16 %v603, %v602
        %v624 = vpack.c.b16 %v605, %v604
        %v625 = vpack.c.b16 %v607, %v606
        %v626 = vpack.c.b16 %v609, %v608
        %v627 = vpack.c.b16 %v611, %v610
        %644 = vmatprep.subr.bf16.mxu0 0
        %645 = vmatpush1.bf16.msra.mxu0 %v612
        %646 = vmatprep.subr.bf16.mxu0 0
        %647 = vmatpush1.bf16.msra.mxu0 %v613
        %648 = vmatprep.subr.bf16.mxu0 0
        %649 = vmatpush1.bf16.msra.mxu0 %v614
        %650 = vmatprep.subr.bf16.mxu0 0
        %651 = vmatpush1.bf16.msra.mxu0 %v615
        %652 = vmatprep.subr.bf16.mxu0 0
        %653 = vmatpush1.bf16.msra.mxu0 %v616
        %654 = vmatprep.subr.bf16.mxu0 0
        %655 = vmatpush1.bf16.msra.mxu0 %v617
        %656 = vmatprep.subr.bf16.mxu0 0
        %657 = vmatpush1.bf16.msra.mxu0 %v618
        %658 = vmatprep.subr.bf16.mxu0 0
        %659 = vmatpush1.bf16.msra.mxu0 %v619
        %660 = vmatprep.subr.bf16.mxu0 0
        %661 = vmatpush1.bf16.msra.mxu0 %v620
        %662 = vmatprep.subr.bf16.mxu0 0
        %663 = vmatpush1.bf16.msra.mxu0 %v621
        %664 = vmatprep.subr.bf16.mxu0 0
        %665 = vmatpush1.bf16.msra.mxu0 %v622
        %666 = vmatprep.subr.bf16.mxu0 0
        %667 = vmatpush1.bf16.msra.mxu0 %v623
        %668 = vmatprep.subr.bf16.mxu0 0
        %669 = vmatpush1.bf16.msra.mxu0 %v624
        %670 = vmatprep.subr.bf16.mxu0 0
        %671 = vmatpush1.bf16.msra.mxu0 %v625
        %672 = vmatprep.subr.bf16.mxu0 0
        %673 = vmatpush1.bf16.msra.mxu0 %v626
        %674 = vmatprep.subr.bf16.mxu0 0
        %675 = vmatpush1.bf16.msra.mxu0 %v627
        %676 = vmatprep.mubr.bf16.mxu0 %v288
        %677 = vmatmul.mubr.bf16.gmra.mrb[0].mxu0 %v287
        %v678 = vpop.f32.mrb[0].mxu0
        %v679 = vadd.f32 0.0, %v678
        %v680 = vpop.f32.mrb[0].mxu0
        %v681 = vpop.f32.mrb[0].mxu0
        %v682 = vpop.f32.mrb[0].mxu0
        %683 = vdwg.mxu0
        %v684 = vadd.f32 %v547, %v679
        %vm685 = vcmask 254976
        %686 = vst.msk [vmem:[%s223] sm:$0x3] %vm685, %v684
        %v687 = vld [vmem:[%s260] sm:$0x3]
        %vm688 = vcmask 1041408
        %v689 = vsel %vm688, %v285, 0.0
        %v690 = vsel %vm688, %v286, 0.0
        %v691 = vadd.f32 %v689, %v690
        %692 = vadd.xlane.f32.xlu0 %v691
        %v693 = vpop.xlane.xlu0 %692
        %v694 = vadd.f32 %v687, %v693
        %vm695 = vcmask 1024
        %696 = vst.msk [vmem:[%s260] sm:$0x3] %vm695, %v694
        %s697 = sand.u32 %s98, 1
        %s698 = scalar_lea.sflag [#allocation3], %s697
        %s699 = sand.u32 %s98, 1
        %s700 = smul.addr %s699, 2
        %s701 = scalar_lea.vmem [#allocation2], %s700
        %p702 = scmp.lt.s32.totalorder %s22, 1
        %s703 = scalar_select %p702, %s22, 1
        %s704 = smul.addr %s703, 2
        %s705 = scalar_lea.vmem %s3, %s704
        // Predicated region
        $region33: #{tpu_custom_call.1} parent=27 // pred_check
          %p706 = pneg %p108
        $region34: #{tpu_custom_call.1} parent=27 // pred_check_branch
          %708 = sbr.rel (%p706) target = $region36
        $region35: #{tpu_custom_call.1} parent=27 // pred_region
          %s710 = ssub.s32 32, 32
          %711 = vsyncadd %s698, %s710
          %s712 = smul.addr %s22, 32
          %s713 = scalar_lea.hbm %s2, %s712
          %s715 = sshll.u32 %s701, 4
          %s716 = int_to_ptr.vmem [resolvable:$true] %s715
          %718 = dma.vmem_to_hbm [thread:$0]  %s716, 32, %s713, %s698
        $region36: #{tpu_custom_call.1} parent=27 // pred_fallthru
          _
        // Predicated region
        $region37: #{tpu_custom_call.1} parent=27 // pred_check
          %p719 = pneg %p134
        $region38: #{tpu_custom_call.1} parent=27 // pred_check_branch
          %721 = sbr.rel (%p719) target = $region40
        $region39: #{tpu_custom_call.1} parent=27 // pred_region
          _
        $region40: #{tpu_custom_call.1} parent=27 // pred_fallthru
          _
      $region28: #{tpu_custom_call.1} parent=5 // pred_fallthru
        _
      %p722 = scmp.le.s32.totalorder 2, %s13
      // Predicated region
      $region41: #{tpu_custom_call.1} parent=5 // pred_check
        %p723 = pneg %p722
      $region42: #{tpu_custom_call.1} parent=5 // pred_check_branch
        %725 = sbr.rel (%p723) target = $region44
      $region43: #{tpu_custom_call.1} parent=5 // pred_region
        %s726 = ssub.s32 %s13, 2
        // Predicated region
        $region45: #{tpu_custom_call.1} parent=43 // pred_check
          %p727 = pneg %p114
        $region46: #{tpu_custom_call.1} parent=43 // pred_check_branch
          %729 = sbr.rel (%p727) target = $region48
        $region47: #{tpu_custom_call.1} parent=43 // pred_region
          %s730 = sand.u32 %s99, 1
          %s731 = scalar_lea.sflag [#allocation3], %s730
          %s732 = sand.u32 %s99, 1
          %s733 = smul.addr %s732, 2
          %s734 = scalar_lea.vmem [#allocation2], %s733
          %735 = dma.done %s731, 32
        $region48: #{tpu_custom_call.1} parent=43 // pred_fallthru
          _
        // Predicated region
        $region49: #{tpu_custom_call.1} parent=43 // pred_check
          %p736 = pneg %p140
        $region50: #{tpu_custom_call.1} parent=43 // pred_check_branch
          %738 = sbr.rel (%p736) target = $region52
        $region51: #{tpu_custom_call.1} parent=43 // pred_region
          %p739 = scmp.lt.s32.totalorder %s24, 1
          %s740 = scalar_select %p739, %s24, 1
          %s741 = smul.addr %s740, 2
          %s742 = scalar_lea.vmem %s3, %s741
        $region52: #{tpu_custom_call.1} parent=43 // pred_fallthru
          _
      $region44: #{tpu_custom_call.1} parent=5 // pred_fallthru
        _
    $region6: #{tpu_custom_call.1} parent=1 // loop_footer
      %s17 = sadd.s32 1, %s13
    $region7: #{tpu_custom_call.1} parent=1 // loop_footer_branch
      %12 = sbr.rel target = $region3
    $region8: #{tpu_custom_call.1} parent=1 // loop_exit
      _
    %743 = vsyncpa [#allocation3], 1
    %s744 = scalar_lea.sflag [#allocation3], 1
    %745 = vsyncpa %s744, 1

</llo_original>
